<compile_context>
chip_gen: v5e
topology: v5e:2x2
jax: 0.10.0
libtpu: 0.0.40
codegen_flags: <defaults>
</compile_context>

<pallas_src>
import functools

import jax
import jax.numpy as jnp
from jax.experimental import pallas as pl
from jax.experimental.pallas import tpu as pltpu

LANE = 128
VMEM_LIMIT = 32 * 1024 * 1024          # fits v5e/v6e (128 MiB) and v7x (64 MiB)
X_RESIDENT_BYTES = 4 * 1024 * 1024     # keep X fully VMEM-resident below this


def _round_up(x, m):
    return ((x + m - 1) // m) * m


def node_tiling(num_nodes):
    """Returns (n_pad, tm, tk): padded node count, row tile, reduction tile."""
    if num_nodes <= 512:
        n_pad = _round_up(max(num_nodes, 1), LANE)
        return n_pad, n_pad, n_pad
    tk = min(2048, _round_up(num_nodes, 512))   # 1-4 MiB int8 A blocks
    n_pad = _round_up(num_nodes, tk)
    tm = 512
    return n_pad, tm, tk


# ----------------------------------------------------------------------------
# Pallas kernels
# ----------------------------------------------------------------------------
def _gcn_layer_kernel(s_k_ref, s_i_ref, a_ref, x_ref, w_ref, b_ref, o_ref,
                      acc_ref, *, tk, x_resident, apply_relu):
    """Fused GCN layer tile: acc += (A+I) @ (diag(s_k) X_k W); finalize with
    diag(s_i), bias and optional ReLU.  Reduction axis k is last in the grid."""
    k = pl.program_id(1)

    @pl.when(k == 0)
    def _():
        acc_ref[...] = jnp.zeros_like(acc_ref)

    if x_resident:
        k_start = pl.multiple_of(k * tk, tk)
        x_tile = x_ref[pl.ds(k_start, tk), :]           # (tk, fin) bf16
    else:
        x_tile = x_ref[...]                             # (tk, fin) bf16

    # Per-tile feature transform (MXU has huge slack in this HBM-bound kernel).
    xw = jnp.dot(x_tile, w_ref[...], preferred_element_type=jnp.float32)
    xw = (xw * s_k_ref[...]).astype(jnp.bfloat16)       # fold D^{-1/2} (reduction side)

    a_tile = a_ref[...].astype(jnp.bfloat16)            # int8 {0,1} -> bf16 (VPU)
    acc_ref[...] += jnp.dot(a_tile, xw, preferred_element_type=jnp.float32)

    @pl.when(k == pl.num_programs(1) - 1)
    def _():
        h = acc_ref[...] * s_i_ref[...] + b_ref[...]    # fold D^{-1/2} (output side)
        if apply_relu:
            h = jnp.maximum(h, 0.0)
        o_ref[...] = h.astype(o_ref.dtype)


def gcn_layer(a_int8, s, x, w, b, *, tm, tk, apply_relu):
    """H = D^{-1/2}(A+I)D^{-1/2} X W + b (optionally ReLU), one pallas_call."""
    n_pad = a_int8.shape[0]
    fin = x.shape[1]
    fout = w.shape[1]
    grid = (n_pad // tm, n_pad // tk)

    x_resident = (x.size * x.dtype.itemsize) <= X_RESIDENT_BYTES
    if x_resident:
        x_spec = pl.BlockSpec((n_pad, fin), lambda i, k: (0, 0))
        x_bytes = x.size * 2
    else:
        x_spec = pl.BlockSpec((tk, fin), lambda i, k: (k, 0))
        x_bytes = grid[0] * x.size * 2

    flops = 2 * n_pad * n_pad * fout + 2 * grid[0] * n_pad * fin * fout
    bytes_accessed = (a_int8.size                       # int8 A streamed once
                      + x_bytes + w.size * 2
                      + n_pad * fout * 2                # bf16 output
                      + 2 * s.size * 4)

    kern = functools.partial(_gcn_layer_kernel, tk=tk, x_resident=x_resident,
                             apply_relu=apply_relu)
    return pl.pallas_call(
        kern,
        out_shape=jax.ShapeDtypeStruct((n_pad, fout), jnp.bfloat16),
        grid_spec=pltpu.PrefetchScalarGridSpec(
            num_scalar_prefetch=0,
            grid=grid,
            in_specs=[
                pl.BlockSpec((tk, 1), lambda i, k: (k, 0)),    # s rows of k-tile
                pl.BlockSpec((tm, 1), lambda i, k: (i, 0)),    # s rows of out tile
                pl.BlockSpec((tm, tk), lambda i, k: (i, k)),   # (A+I) int8
                x_spec,                                        # X (resident/blocked)
                pl.BlockSpec((fin, fout), lambda i, k: (0, 0)),
                pl.BlockSpec((1, fout), lambda i, k: (0, 0)),
            ],
            out_specs=pl.BlockSpec((tm, fout), lambda i, k: (i, 0)),
            scratch_shapes=[pltpu.VMEM((tm, fout), jnp.float32)],
        ),
        compiler_params=pltpu.CompilerParams(
            dimension_semantics=("parallel", "arbitrary"),
            vmem_limit_bytes=VMEM_LIMIT,
        ),
        cost_estimate=pl.CostEstimate(
            flops=flops, transcendentals=0, bytes_accessed=bytes_accessed),
    )(s, s, a_int8, x, w, b)


def _readout_kernel(p_ref, h_ref, w_ref, b_ref, o_ref, pool_acc):
    """Global mean pool (node-tile reduction) + linear + softmax, fused."""
    k = pl.program_id(0)

    @pl.when(k == 0)
    def _():
        pool_acc[...] = jnp.zeros_like(pool_acc)

    # bf16 x bf16 MXU dot, f32 accumulation.
    pool_acc[...] += jnp.dot(p_ref[...], h_ref[...],
                             preferred_element_type=jnp.float32)

    @pl.when(k == pl.num_programs(0) - 1)
    def _():
        logits = jnp.dot(pool_acc[...].astype(jnp.bfloat16), w_ref[...],
                         preferred_element_type=jnp.float32) + b_ref[...]
        m = jnp.max(logits, axis=1, keepdims=True)
        e = jnp.exp(logits - m)                         # f32 softmax path
        o_ref[...] = (e / jnp.sum(e, axis=1, keepdims=True)).astype(o_ref.dtype)


def readout(pool_mat, h, w, b, *, tk):
    g_pad, n_pad = pool_mat.shape
    f_pad = h.shape[1]
    c_pad = w.shape[1]
    return pl.pallas_call(
        _readout_kernel,
        out_shape=jax.ShapeDtypeStruct((g_pad, c_pad), jnp.float32),
        grid_spec=pltpu.PrefetchScalarGridSpec(
            num_scalar_prefetch=0,
            grid=(n_pad // tk,),
            in_specs=[
                pl.BlockSpec((g_pad, tk), lambda k: (0, k)),
                pl.BlockSpec((tk, f_pad), lambda k: (k, 0)),
                pl.BlockSpec((f_pad, c_pad), lambda k: (0, 0)),
                pl.BlockSpec((1, c_pad), lambda k: (0, 0)),
            ],
            out_specs=pl.BlockSpec((g_pad, c_pad), lambda k: (0, 0)),
            scratch_shapes=[pltpu.VMEM((g_pad, f_pad), jnp.float32)],
        ),
        compiler_params=pltpu.CompilerParams(
            dimension_semantics=("arbitrary",),
            vmem_limit_bytes=VMEM_LIMIT,
        ),
    )(pool_mat, h, w, b)


# ----------------------------------------------------------------------------
# Plain-JAX glue: graph preprocessing + params (padded to lane-dense shapes)
# ----------------------------------------------------------------------------
def adjacency_and_scale(edge_index, num_nodes, n_pad):
    """(A + I) as exact-{0,1} int8, padded, plus D^{-1/2} column vector (f32)."""
    src, dst = edge_index
    a = jnp.zeros((num_nodes, num_nodes), jnp.float32)
    a = a.at[src, dst].set(1.0)
    a = a.at[dst, src].set(1.0)                       # treat as undirected
    diag = jnp.arange(num_nodes)
    a = a.at[diag, diag].set(1.0)                     # self loops (dedup-safe)
    deg = jnp.sum(a, axis=1)
    s = jnp.where(deg > 0, 1.0 / jnp.sqrt(deg), 0.0)
    a_pad = jnp.pad(a, ((0, n_pad - num_nodes), (0, n_pad - num_nodes)))
    s_pad = jnp.pad(s, (0, n_pad - num_nodes)).reshape(n_pad, 1)
    # TODO(synk): for large sparse graphs replace this dense O(N^2) (A+I) with a
    # CSR/padded-neighbor SpMM driven by PrefetchScalarGridSpec row offsets.
    return a_pad.astype(jnp.int8), s_pad.astype(jnp.float32)


def mean_pool_matrix(batch, num_graphs, n_pad, g_pad):
    """P[g, n] = 1/|graph_g| if batch[n] == g else 0 (global_mean_pool), bf16."""
    num_nodes = batch.shape[0]
    one_hot = (batch[None, :] == jnp.arange(num_graphs)[:, None]).astype(jnp.float32)
    counts = jnp.maximum(jnp.sum(one_hot, axis=1, keepdims=True), 1.0)
    p = one_hot / counts
    p = jnp.pad(p, ((0, g_pad - num_graphs), (0, n_pad - num_nodes)))
    return p.astype(jnp.bfloat16)


def glorot_padded(key, fan_in, fan_out, pad_in, pad_out, dtype):
    lim = float(jnp.sqrt(6.0 / (fan_in + fan_out)))
    w = jax.random.uniform(key, (fan_in, fan_out), jnp.float32, -lim, lim)
    w = jnp.pad(w, ((0, pad_in - fan_in), (0, pad_out - fan_out)))
    return w.astype(dtype)


def init_params(key, num_layers, nfeat, nhid, nclass, fin_pad, fh_pad, fc_pad):
    keys = jax.random.split(key, num_layers + 2)
    convs = []
    fin, fin_p = nfeat, fin_pad
    for i in range(num_layers):
        w = glorot_padded(keys[i], fin, nhid, fin_p, fh_pad, jnp.bfloat16)
        b = jnp.zeros((1, fh_pad), jnp.float32)
        convs.append((w, b))
        fin, fin_p = nhid, fh_pad
    w_last = glorot_padded(keys[num_layers], nhid, nhid, fh_pad, fh_pad, jnp.bfloat16)
    b_last = jnp.zeros((1, fh_pad), jnp.float32)
    lin_w = glorot_padded(keys[num_layers + 1], nhid, nclass, fh_pad, fc_pad,
                          jnp.bfloat16)
    # padded class lanes get a huge negative f32 bias so softmax ignores them
    lin_b = jnp.concatenate(
        [jnp.zeros((1, nclass), jnp.float32),
         jnp.full((1, fc_pad - nclass), -1e30, jnp.float32)], axis=1)
    return {"convs": convs, "conv_last": (w_last, b_last),
            "lin_w": lin_w, "lin_b": lin_b}


def gcn_forward(params, a_int8, s, x, pool_mat, *, tm, tk):
    h = x
    for w, b in params["convs"]:
        h = gcn_layer(a_int8, s, h, w, b, tm=tm, tk=tk, apply_relu=True)
        # dropout: identity at inference (training=False)
    w_last, b_last = params["conv_last"]
    h = gcn_layer(a_int8, s, h, w_last, b_last, tm=tm, tk=tk, apply_relu=False)
    # TODO(synk): for single-tile graphs (grid == (1,1)) the last layer and the
    # readout could be fused into one kernel to shave one more launch.
    return readout(pool_mat, h, params["lin_w"], params["lin_b"], tk=tk)


# ----------------------------------------------------------------------------
# Demo
# ----------------------------------------------------------------------------
if __name__ == "__main__":
    num_layers = 2
    nfeat, nhid, nclass = 8, 32, 4
    nodes_per_graph, num_graphs = 8, 2
    num_nodes = nodes_per_graph * num_graphs

    n_pad, tm, tk = node_tiling(num_nodes)
    fin_pad = _round_up(nfeat, LANE)
    fh_pad = _round_up(nhid, LANE)
    fc_pad = _round_up(nclass, LANE)
    g_pad = _round_up(num_graphs, 8)

    key = jax.random.PRNGKey(0)
    k_x, k_p = jax.random.split(key)

    # Node features [N, nfeat], padded to lane-dense [n_pad, fin_pad] in bf16.
    x = jax.random.normal(k_x, (num_nodes, nfeat), jnp.float32)
    x_pad = jnp.pad(x, ((0, n_pad - num_nodes),
                        (0, fin_pad - nfeat))).astype(jnp.bfloat16)

    # Two disjoint ring graphs (nodes 0..7 -> graph 0, 8..15 -> graph 1).
    src, dst = [], []
    for g in range(num_graphs):
        base = g * nodes_per_graph
        for i in range(nodes_per_graph):
            src.append(base + i)
            dst.append(base + (i + 1) % nodes_per_graph)
    edge_index = jnp.array([src, dst], dtype=jnp.int32)
    batch = jnp.repeat(jnp.arange(num_graphs, dtype=jnp.int32), nodes_per_graph)

    a_int8, s = adjacency_and_scale(edge_index, num_nodes, n_pad)
    pool_mat = mean_pool_matrix(batch, num_graphs, n_pad, g_pad)
    params = init_params(k_p, num_layers, nfeat, nhid, nclass,
                         fin_pad, fh_pad, fc_pad)

    out_pad = gcn_forward(params, a_int8, s, x_pad, pool_mat, tm=tm, tk=tk)
    out = out_pad[:num_graphs, :nclass]
    out = jax.block_until_ready(out)

    assert out.shape == (num_graphs, nclass)
    # softmax rows sum to 1 (padded class lanes masked by the -1e30 f32 bias)
    assert bool(jnp.allclose(jnp.sum(out, axis=1), 1.0, atol=1e-4))
    print("KERNEL_OK")
</pallas_src>

<mosaic_0001>
module attributes {stable_mosaic.version = 11 : i64} {
  func.func @_gcn_layer_kernel(%arg0: i32, %arg1: i32, %arg2: memref<128x1xf32, #tpu.memory_space<vmem>>, %arg3: memref<128x1xf32, #tpu.memory_space<vmem>>, %arg4: memref<128x128xi8, #tpu.memory_space<vmem>>, %arg5: memref<128x128xbf16, #tpu.memory_space<vmem>>, %arg6: memref<128x128xbf16, #tpu.memory_space<vmem>>, %arg7: memref<1x128xf32, #tpu.memory_space<vmem>>, %arg8: memref<128x128xbf16, #tpu.memory_space<vmem>>, %arg9: memref<128x128xf32, #tpu.memory_space<vmem>>) attributes {dimension_semantics = [#tpu.dimension_semantics<parallel>, #tpu.dimension_semantics<arbitrary>], iteration_bounds = array<i64: 1, 1>, scalar_prefetch = 0 : i64, scratch_operands = 1 : i64, tpu.core_type = #tpu.core_type<tc>, window_params = [{transform_indices = @transform_0, window_bounds = array<i64: 128, 1>}, {transform_indices = @transform_1, window_bounds = array<i64: 128, 1>}, {transform_indices = @transform_2, window_bounds = array<i64: 128, 128>}, {pipeline_mode = #tpu.pipeline_mode<synchronous>, transform_indices = @transform_3, window_bounds = array<i64: 128, 128>}, {pipeline_mode = #tpu.pipeline_mode<synchronous>, transform_indices = @transform_4, window_bounds = array<i64: 128, 128>}, {pipeline_mode = #tpu.pipeline_mode<synchronous>, transform_indices = @transform_5, window_bounds = array<i64: 1, 128>}, {transform_indices = @transform_6, window_bounds = array<i64: 128, 128>}]} {
    %c0_i32 = arith.constant 0 : i32
    %0 = arith.cmpi eq, %arg1, %c0_i32 : i32
    %1 = arith.extui %0 : i1 to i32
    %c0_i32_0 = arith.constant 0 : i32
    %2 = arith.cmpi ne, %1, %c0_i32_0 : i32
    scf.if %2 {
      %cst_14 = arith.constant 0.000000e+00 : f32
      %22 = vector.broadcast %cst_14 : f32 to vector<128x128xf32>
      %c0_15 = arith.constant 0 : index
      %c0_16 = arith.constant 0 : index
      %23 = vector.load %arg9[%c0_15, %c0_16] : memref<128x128xf32, #tpu.memory_space<vmem>>, vector<128x128xf32>
      tpu.vector_store %arg9[%c0_15, %c0_16], %22 {strides = array<i32>} : memref<128x128xf32, #tpu.memory_space<vmem>>, vector<128x128xf32>,
    } else {
    }
    %c128_i32 = arith.constant 128 : i32
    %3 = arith.muli %arg1, %c128_i32 : i32
    %4 = tpu.assume_multiple %3, 128 : i32
    %5 = arith.index_cast %4 : i32 to index
    %c0 = arith.constant 0 : index
    %6 = vector.load %arg5[%5, %c0] : memref<128x128xbf16, #tpu.memory_space<vmem>>, vector<128x128xbf16>
    %c0_1 = arith.constant 0 : index
    %c0_2 = arith.constant 0 : index
    %7 = vector.load %arg6[%c0_1, %c0_2] : memref<128x128xbf16, #tpu.memory_space<vmem>>, vector<128x128xbf16>
    %cst = arith.constant dense<0.000000e+00> : vector<128x128xf32>
    %8 = tpu.matmul %6, %7, %cst {dimension_numbers = #tpu.dot_dimension_numbers<[1], [0], [0], [1], [0, 0, 1, 1], [], []>} : vector<128x128xbf16>, vector<128x128xbf16>, vector<128x128xf32> -> vector<128x128xf32>
    %c0_3 = arith.constant 0 : index
    %c0_4 = arith.constant 0 : index
    %9 = vector.load %arg2[%c0_3, %c0_4] : memref<128x1xf32, #tpu.memory_space<vmem>>, vector<128x1xf32>
    %10 = vector.broadcast %9 : vector<128x1xf32> to vector<128x128xf32>
    %11 = arith.mulf %8, %10 : vector<128x128xf32>
    %12 = arith.truncf %11 : vector<128x128xf32> to vector<128x128xbf16>
    %c0_5 = arith.constant 0 : index
    %c0_6 = arith.constant 0 : index
    %13 = vector.load %arg4[%c0_5, %c0_6] : memref<128x128xi8, #tpu.memory_space<vmem>>, vector<128x128xi8>
    %14 = arith.sitofp %13 : vector<128x128xi8> to vector<128x128xbf16>
    %c0_7 = arith.constant 0 : index
    %c0_8 = arith.constant 0 : index
    %15 = vector.load %arg9[%c0_7, %c0_8] : memref<128x128xf32, #tpu.memory_space<vmem>>, vector<128x128xf32>
    %cst_9 = arith.constant dense<0.000000e+00> : vector<128x128xf32>
    %16 = tpu.matmul %14, %12, %cst_9 {dimension_numbers = #tpu.dot_dimension_numbers<[1], [0], [0], [1], [0, 0, 1, 1], [], []>} : vector<128x128xbf16>, vector<128x128xbf16>, vector<128x128xf32> -> vector<128x128xf32>
    %17 = arith.addf %15, %16 : vector<128x128xf32>
    %c0_10 = arith.constant 0 : index
    %c0_11 = arith.constant 0 : index
    %18 = vector.load %arg9[%c0_10, %c0_11] : memref<128x128xf32, #tpu.memory_space<vmem>>, vector<128x128xf32>
    tpu.vector_store %arg9[%c0_10, %c0_11], %17 {strides = array<i32>} : memref<128x128xf32, #tpu.memory_space<vmem>>, vector<128x128xf32>,
    %c0_i32_12 = arith.constant 0 : i32
    %19 = arith.cmpi eq, %arg1, %c0_i32_12 : i32
    %20 = arith.extui %19 : i1 to i32
    %c0_i32_13 = arith.constant 0 : i32
    %21 = arith.cmpi ne, %20, %c0_i32_13 : i32
    scf.if %21 {
      %c0_14 = arith.constant 0 : index
      %c0_15 = arith.constant 0 : index
      %22 = vector.load %arg9[%c0_14, %c0_15] : memref<128x128xf32, #tpu.memory_space<vmem>>, vector<128x128xf32>
      %c0_16 = arith.constant 0 : index
      %c0_17 = arith.constant 0 : index
      %23 = vector.load %arg3[%c0_16, %c0_17] : memref<128x1xf32, #tpu.memory_space<vmem>>, vector<128x1xf32>
      %24 = vector.broadcast %23 : vector<128x1xf32> to vector<128x128xf32>
      %25 = arith.mulf %22, %24 : vector<128x128xf32>
      %c0_18 = arith.constant 0 : index
      %c0_19 = arith.constant 0 : index
      %26 = vector.load %arg7[%c0_18, %c0_19] : memref<1x128xf32, #tpu.memory_space<vmem>>, vector<1x128xf32>
      %27 = vector.broadcast %26 : vector<1x128xf32> to vector<128x128xf32>
      %28 = arith.addf %25, %27 : vector<128x128xf32>
      %cst_20 = arith.constant 0.000000e+00 : f32
      %29 = vector.broadcast %cst_20 : f32 to vector<128x128xf32>
      %30 = arith.maximumf %28, %29 : vector<128x128xf32>
      %31 = arith.truncf %30 : vector<128x128xf32> to vector<128x128xbf16>
      %c0_21 = arith.constant 0 : index
      %c0_22 = arith.constant 0 : index
      %32 = vector.load %arg8[%c0_21, %c0_22] : memref<128x128xbf16, #tpu.memory_space<vmem>>, vector<128x128xbf16>
      tpu.vector_store %arg8[%c0_21, %c0_22], %31 {strides = array<i32>} : memref<128x128xbf16, #tpu.memory_space<vmem>>, vector<128x128xbf16>,
    } else {
    }
    return
  }
  func.func @transform_0(%arg0: i32, %arg1: i32) -> (i32, i32) {
    %c0_i32 = arith.constant 0 : i32
    %c0_i32_0 = arith.constant 0 : i32
    return %arg1, %c0_i32 : i32, i32
  }
  func.func @transform_1(%arg0: i32, %arg1: i32) -> (i32, i32) {
    %c0_i32 = arith.constant 0 : i32
    %c0_i32_0 = arith.constant 0 : i32
    return %arg0, %c0_i32 : i32, i32
  }
  func.func @transform_2(%arg0: i32, %arg1: i32) -> (i32, i32) {
    %c0_i32 = arith.constant 0 : i32
    return %arg0, %arg1 : i32, i32
  }
  func.func @transform_3(%arg0: i32, %arg1: i32) -> (i32, i32) {
    %c0_i32 = arith.constant 0 : i32
    %c0_i32_0 = arith.constant 0 : i32
    %c0_i32_1 = arith.constant 0 : i32
    return %c0_i32, %c0_i32_0 : i32, i32
  }
  func.func @transform_4(%arg0: i32, %arg1: i32) -> (i32, i32) {
    %c0_i32 = arith.constant 0 : i32
    %c0_i32_0 = arith.constant 0 : i32
    %c0_i32_1 = arith.constant 0 : i32
    return %c0_i32, %c0_i32_0 : i32, i32
  }
  func.func @transform_5(%arg0: i32, %arg1: i32) -> (i32, i32) {
    %c0_i32 = arith.constant 0 : i32
    %c0_i32_0 = arith.constant 0 : i32
    %c0_i32_1 = arith.constant 0 : i32
    return %c0_i32, %c0_i32_0 : i32, i32
  }
  func.func @transform_6(%arg0: i32, %arg1: i32) -> (i32, i32) {
    %c0_i32 = arith.constant 0 : i32
    %c0_i32_0 = arith.constant 0 : i32
    return %arg0, %c0_i32 : i32, i32
  }
}

</mosaic_0001>

<llo_original>
// kernel: tpu_custom_call.1
$region0: #{tpu_custom_call.1}
  #allocation0 [shape = 'u32[]', space=smem, size = 0x4, offset = 0x4, fixed_abs, tag = 'smem constant byte address 0x4 - core index']
  #allocation1 [shape = 'u32[72,128]{1,0:T(1,128)}', space=vmem, size = 0x9000, scoped, tag = 'internal scratch']
  #allocation2 [shape = 'f32[128,128]{1,0:T(8,128)}', space=vmem, size = 0x10000, scoped, tag = 'scratch operand']
  %s0 = inlined_call_operand.vmem [shape: f32[128,1], index: 0, kind: input, shape index: {}]
  %s1 = inlined_call_operand.vmem [shape: f32[128,1], index: 1, kind: input, shape index: {}]
  %s2 = inlined_call_operand.vmem [shape: s8[128,128], index: 2, kind: input, shape index: {}]
  %s3 = inlined_call_operand.vmem [shape: bf16[128,128], index: 3, kind: input, shape index: {}]
  %s4 = inlined_call_operand.vmem [shape: bf16[128,128], index: 4, kind: input, shape index: {}]
  %s5 = inlined_call_operand.vmem [shape: f32[1,128], index: 5, kind: input, shape index: {}]
  %s6 = inlined_call_operand.hbm [shape: bf16[128,128], index: 6, kind: output, shape index: {}]
  %s7 = sld [smem:[#allocation0]]
  $region42: #{tpu_custom_call.1} parent=0
    _
  %s9 = ssub.s32 1, %s7
  %s10 = scalar_select 0, %s9, %s7
  $region1: #{tpu_custom_call.1} parent=0
    #allocation3 [shape = 'u8[32768]{0}', space=vmem, size = 0x8000, scoped, tag = 'output window, operand 0, single buffered']
    #allocation4 [shape = 's32[1]{0}', space=sflag, size = 0x4, scoped, tag = 'scoped memory for tpu_custom_call.1']
    %11 = vsyncpa [#allocation4], 0
    // Predicated region
    $region2: #{tpu_custom_call.1} parent=1 // pred_check
      _
    $region3: #{tpu_custom_call.1} parent=1 // pred_check_branch
      %13 = sbr.rel (0) target = $region5
    $region4: #{tpu_custom_call.1} parent=1 // pred_region
      _
    $region5: #{tpu_custom_call.1} parent=1 // pred_fallthru
      _
    // Predicated region
    $region6: #{tpu_custom_call.1} parent=1 // pred_check
      _
    $region7: #{tpu_custom_call.1} parent=1 // pred_check_branch
      %15 = sbr.rel (0) target = $region9
    $region8: #{tpu_custom_call.1} parent=1 // pred_region
      _
    $region9: #{tpu_custom_call.1} parent=1 // pred_fallthru
      _
    // Predicated region
    $region10: #{tpu_custom_call.1} parent=1 // pred_check
      _
    $region11: #{tpu_custom_call.1} parent=1 // pred_check_branch
      %17 = sbr.rel (0) target = $region13
    $region12: #{tpu_custom_call.1} parent=1 // pred_region
      _
    $region13: #{tpu_custom_call.1} parent=1 // pred_fallthru
      _
    // Predicated region
    $region14: #{tpu_custom_call.1} parent=1 // pred_check
      _
    $region15: #{tpu_custom_call.1} parent=1 // pred_check_branch
      %19 = sbr.rel (0) target = $region17
    $region16: #{tpu_custom_call.1} parent=1 // pred_region
      _
    $region17: #{tpu_custom_call.1} parent=1 // pred_fallthru
      _
    // Predicated region
    $region18: #{tpu_custom_call.1} parent=1 // pred_check
      _
    $region19: #{tpu_custom_call.1} parent=1 // pred_check_branch
      %21 = sbr.rel (0) target = $region21
    $region20: #{tpu_custom_call.1} parent=1 // pred_region
      _
    $region21: #{tpu_custom_call.1} parent=1 // pred_fallthru
      _
    // Predicated region
    $region22: #{tpu_custom_call.1} parent=1 // pred_check
      _
    $region23: #{tpu_custom_call.1} parent=1 // pred_check_branch
      %23 = sbr.rel (0) target = $region25
    $region24: #{tpu_custom_call.1} parent=1 // pred_region
      _
    $region25: #{tpu_custom_call.1} parent=1 // pred_fallthru
      _
    %p24 = scmp.eq.s32.totalorder 0, 0
    // Predicated region
    $region26: #{tpu_custom_call.1} parent=1 // pred_check
      %p25 = pneg %p24
    $region27: #{tpu_custom_call.1} parent=1 // pred_check_branch
      %27 = sbr.rel (%p25) target = $region29
    $region28: #{tpu_custom_call.1} parent=1 // pred_region
      %28 = vst [vmem:[#allocation2] sm:$0xff] 0.0
      %29 = vst [vmem:[#allocation2 + $0x8] sm:$0xff] 0.0
      %30 = vst [vmem:[#allocation2 + $0x10] sm:$0xff] 0.0
      %31 = vst [vmem:[#allocation2 + $0x18] sm:$0xff] 0.0
      %32 = vst [vmem:[#allocation2 + $0x20] sm:$0xff] 0.0
      %33 = vst [vmem:[#allocation2 + $0x28] sm:$0xff] 0.0
      %34 = vst [vmem:[#allocation2 + $0x30] sm:$0xff] 0.0
      %35 = vst [vmem:[#allocation2 + $0x38] sm:$0xff] 0.0
      %36 = vst [vmem:[#allocation2 + $0x40] sm:$0xff] 0.0
      %37 = vst [vmem:[#allocation2 + $0x48] sm:$0xff] 0.0
      %38 = vst [vmem:[#allocation2 + $0x50] sm:$0xff] 0.0
      %39 = vst [vmem:[#allocation2 + $0x58] sm:$0xff] 0.0
      %40 = vst [vmem:[#allocation2 + $0x60] sm:$0xff] 0.0
      %41 = vst [vmem:[#allocation2 + $0x68] sm:$0xff] 0.0
      %42 = vst [vmem:[#allocation2 + $0x70] sm:$0xff] 0.0
      %43 = vst [vmem:[#allocation2 + $0x78] sm:$0xff] 0.0
    $region29: #{tpu_custom_call.1} parent=1 // pred_fallthru
      _
    %s44 = smul.u32 0, 128
    %s45 = sshra.s32 %s44, 3
    %s46 = sand.u32 %s44, 7
    %s47 = smul.addr %s45, 4
    %s48 = scalar_lea.vmem %s3, %s47
    %v49 = vld [vmem:[%s48] sm:$0xf]
    %v50 = vld [vmem:[%s48 + $0x4] sm:$0xf]
    %v51 = vld [vmem:[%s48 + $0x8] sm:$0xf]
    %v52 = vld [vmem:[%s48 + $0xc] sm:$0xf]
    %v53 = vld [vmem:[%s48 + $0x10] sm:$0xf]
    %v54 = vld [vmem:[%s48 + $0x14] sm:$0xf]
    %v55 = vld [vmem:[%s48 + $0x18] sm:$0xf]
    %v56 = vld [vmem:[%s48 + $0x1c] sm:$0xf]
    %v57 = vld [vmem:[%s48 + $0x20] sm:$0xf]
    %v58 = vld [vmem:[%s48 + $0x24] sm:$0xf]
    %v59 = vld [vmem:[%s48 + $0x28] sm:$0xf]
    %v60 = vld [vmem:[%s48 + $0x2c] sm:$0xf]
    %v61 = vld [vmem:[%s48 + $0x30] sm:$0xf]
    %v62 = vld [vmem:[%s48 + $0x34] sm:$0xf]
    %v63 = vld [vmem:[%s48 + $0x38] sm:$0xf]
    %v64 = vld [vmem:[%s48 + $0x3c] sm:$0xf]
    %v65 = vld [vmem:[%s4] sm:$0xf]
    %v66 = vld [vmem:[%s4 + $0x4] sm:$0xf]
    %v67 = vld [vmem:[%s4 + $0x8] sm:$0xf]
    %v68 = vld [vmem:[%s4 + $0xc] sm:$0xf]
    %v69 = vld [vmem:[%s4 + $0x10] sm:$0xf]
    %v70 = vld [vmem:[%s4 + $0x14] sm:$0xf]
    %v71 = vld [vmem:[%s4 + $0x18] sm:$0xf]
    %v72 = vld [vmem:[%s4 + $0x1c] sm:$0xf]
    %v73 = vld [vmem:[%s4 + $0x20] sm:$0xf]
    %v74 = vld [vmem:[%s4 + $0x24] sm:$0xf]
    %v75 = vld [vmem:[%s4 + $0x28] sm:$0xf]
    %v76 = vld [vmem:[%s4 + $0x2c] sm:$0xf]
    %v77 = vld [vmem:[%s4 + $0x30] sm:$0xf]
    %v78 = vld [vmem:[%s4 + $0x34] sm:$0xf]
    %v79 = vld [vmem:[%s4 + $0x38] sm:$0xf]
    %v80 = vld [vmem:[%s4 + $0x3c] sm:$0xf]
    %v97 = vunpack.c.l.b16 %v49
    %v98 = vunpack.c.l.b16 %v50
    %v99 = vunpack.c.l.b16 %v51
    %v100 = vunpack.c.l.b16 %v52
    %v101 = vunpack.c.l.b16 %v53
    %v102 = vunpack.c.l.b16 %v54
    %v103 = vunpack.c.l.b16 %v55
    %v104 = vunpack.c.l.b16 %v56
    %v105 = vunpack.c.l.b16 %v57
    %v106 = vunpack.c.l.b16 %v58
    %v107 = vunpack.c.l.b16 %v59
    %v108 = vunpack.c.l.b16 %v60
    %v109 = vunpack.c.l.b16 %v61
    %v110 = vunpack.c.l.b16 %v62
    %v111 = vunpack.c.l.b16 %v63
    %v112 = vunpack.c.l.b16 %v64
    %v113 = vpack.c.b16 %v98, %v97
    %v114 = vpack.c.b16 %v100, %v99
    %v115 = vpack.c.b16 %v102, %v101
    %v116 = vpack.c.b16 %v104, %v103
    %v117 = vpack.c.b16 %v106, %v105
    %v118 = vpack.c.b16 %v108, %v107
    %v119 = vpack.c.b16 %v110, %v109
    %v120 = vpack.c.b16 %v112, %v111
    %v145 = vunpack.c.l.b16 %v65
    %v146 = vunpack.c.l.b16 %v66
    %v147 = vunpack.c.l.b16 %v67
    %v148 = vunpack.c.l.b16 %v68
    %v149 = vunpack.c.l.b16 %v69
    %v150 = vunpack.c.l.b16 %v70
    %v151 = vunpack.c.l.b16 %v71
    %v152 = vunpack.c.l.b16 %v72
    %v153 = vunpack.c.l.b16 %v73
    %v154 = vunpack.c.l.b16 %v74
    %v155 = vunpack.c.l.b16 %v75
    %v156 = vunpack.c.l.b16 %v76
    %v157 = vunpack.c.l.b16 %v77
    %v158 = vunpack.c.l.b16 %v78
    %v159 = vunpack.c.l.b16 %v79
    %v160 = vunpack.c.l.b16 %v80
    %v161 = vpack.c.b16 %v146, %v145
    %v162 = vpack.c.b16 %v148, %v147
    %v163 = vpack.c.b16 %v150, %v149
    %v164 = vpack.c.b16 %v152, %v151
    %v165 = vpack.c.b16 %v154, %v153
    %v166 = vpack.c.b16 %v156, %v155
    %v167 = vpack.c.b16 %v158, %v157
    %v168 = vpack.c.b16 %v160, %v159
    %177 = vmatpush.bf16.msra.mxu0 %v168
    %178 = vmatpush.bf16.msra.mxu0 %v167
    %179 = vmatpush.bf16.msra.mxu0 %v166
    %180 = vmatpush.bf16.msra.mxu0 %v165
    %181 = vmatpush.bf16.msra.mxu0 %v164
    %182 = vmatpush.bf16.msra.mxu0 %v163
    %183 = vmatpush.bf16.msra.mxu0 %v162
    %184 = vmatpush.bf16.msra.mxu0 %v161
    %185 = vmatmul.bf16.gmra.mxu0 %v113
    %v186 = vpop.f32.mrf.mxu0
    %v187 = vadd.f32 0.0, %v186
    %v188 = vpop.f32.mrf.mxu0
    %v189 = vadd.f32 0.0, %v188
    %190 = vmatmul.bf16.gmra.mxu0 %v114
    %v191 = vpop.f32.mrf.mxu0
    %v192 = vadd.f32 0.0, %v191
    %v193 = vpop.f32.mrf.mxu0
    %v194 = vadd.f32 0.0, %v193
    %195 = vmatmul.bf16.gmra.mxu0 %v115
    %v196 = vpop.f32.mrf.mxu0
    %v197 = vadd.f32 0.0, %v196
    %v198 = vpop.f32.mrf.mxu0
    %v199 = vadd.f32 0.0, %v198
    %200 = vmatmul.bf16.gmra.mxu0 %v116
    %v201 = vpop.f32.mrf.mxu0
    %v202 = vadd.f32 0.0, %v201
    %v203 = vpop.f32.mrf.mxu0
    %v204 = vadd.f32 0.0, %v203
    %205 = vmatmul.bf16.gmra.mxu0 %v117
    %v206 = vpop.f32.mrf.mxu0
    %v207 = vadd.f32 0.0, %v206
    %v208 = vpop.f32.mrf.mxu0
    %v209 = vadd.f32 0.0, %v208
    %210 = vmatmul.bf16.gmra.mxu0 %v118
    %v211 = vpop.f32.mrf.mxu0
    %v212 = vadd.f32 0.0, %v211
    %v213 = vpop.f32.mrf.mxu0
    %v214 = vadd.f32 0.0, %v213
    %215 = vmatmul.bf16.gmra.mxu0 %v119
    %v216 = vpop.f32.mrf.mxu0
    %v217 = vadd.f32 0.0, %v216
    %v218 = vpop.f32.mrf.mxu0
    %v219 = vadd.f32 0.0, %v218
    %220 = vmatmul.bf16.gmra.mxu0 %v120
    %v221 = vpop.f32.mrf.mxu0
    %v222 = vadd.f32 0.0, %v221
    %v223 = vpop.f32.mrf.mxu0
    %v224 = vadd.f32 0.0, %v223
    %225 = vdwg.mxu0
    %v226 = vld [vmem:[%s0] sm:$0xff]
    %v227 = vld [vmem:[%s0 + $0x8] sm:$0xff]
    %v228 = vld [vmem:[%s0 + $0x10] sm:$0xff]
    %v229 = vld [vmem:[%s0 + $0x18] sm:$0xff]
    %v230 = vld [vmem:[%s0 + $0x20] sm:$0xff]
    %v231 = vld [vmem:[%s0 + $0x28] sm:$0xff]
    %v232 = vld [vmem:[%s0 + $0x30] sm:$0xff]
    %v233 = vld [vmem:[%s0 + $0x38] sm:$0xff]
    %v234 = vld [vmem:[%s0 + $0x40] sm:$0xff]
    %v235 = vld [vmem:[%s0 + $0x48] sm:$0xff]
    %v236 = vld [vmem:[%s0 + $0x50] sm:$0xff]
    %v237 = vld [vmem:[%s0 + $0x58] sm:$0xff]
    %v238 = vld [vmem:[%s0 + $0x60] sm:$0xff]
    %v239 = vld [vmem:[%s0 + $0x68] sm:$0xff]
    %v240 = vld [vmem:[%s0 + $0x70] sm:$0xff]
    %v241 = vld [vmem:[%s0 + $0x78] sm:$0xff]
    %243 = vset.pattern.permute.xlu0 0
    %244 = vperm.xlu0 %243, %v226
    %v245 = vpop.permute.xlu0 %244
    %248 = vset.pattern.permute.xlu0 0
    %249 = vperm.xlu0 %248, %v227
    %v250 = vpop.permute.xlu0 %249
    %253 = vset.pattern.permute.xlu0 0
    %254 = vperm.xlu0 %253, %v228
    %v255 = vpop.permute.xlu0 %254
    %258 = vset.pattern.permute.xlu0 0
    %259 = vperm.xlu0 %258, %v229
    %v260 = vpop.permute.xlu0 %259
    %263 = vset.pattern.permute.xlu0 0
    %264 = vperm.xlu0 %263, %v230
    %v265 = vpop.permute.xlu0 %264
    %268 = vset.pattern.permute.xlu0 0
    %269 = vperm.xlu0 %268, %v231
    %v270 = vpop.permute.xlu0 %269
    %273 = vset.pattern.permute.xlu0 0
    %274 = vperm.xlu0 %273, %v232
    %v275 = vpop.permute.xlu0 %274
    %278 = vset.pattern.permute.xlu0 0
    %279 = vperm.xlu0 %278, %v233
    %v280 = vpop.permute.xlu0 %279
    %283 = vset.pattern.permute.xlu0 0
    %284 = vperm.xlu0 %283, %v234
    %v285 = vpop.permute.xlu0 %284
    %288 = vset.pattern.permute.xlu0 0
    %289 = vperm.xlu0 %288, %v235
    %v290 = vpop.permute.xlu0 %289
    %293 = vset.pattern.permute.xlu0 0
    %294 = vperm.xlu0 %293, %v236
    %v295 = vpop.permute.xlu0 %294
    %298 = vset.pattern.permute.xlu0 0
    %299 = vperm.xlu0 %298, %v237
    %v300 = vpop.permute.xlu0 %299
    %303 = vset.pattern.permute.xlu0 0
    %304 = vperm.xlu0 %303, %v238
    %v305 = vpop.permute.xlu0 %304
    %308 = vset.pattern.permute.xlu0 0
    %309 = vperm.xlu0 %308, %v239
    %v310 = vpop.permute.xlu0 %309
    %313 = vset.pattern.permute.xlu0 0
    %314 = vperm.xlu0 %313, %v240
    %v315 = vpop.permute.xlu0 %314
    %318 = vset.pattern.permute.xlu0 0
    %319 = vperm.xlu0 %318, %v241
    %v320 = vpop.permute.xlu0 %319
    %v322 = vmul.f32 %v187, %v245
    %v323 = vmul.f32 %v189, %v250
    %v324 = vmul.f32 %v192, %v255
    %v325 = vmul.f32 %v194, %v260
    %v326 = vmul.f32 %v197, %v265
    %v327 = vmul.f32 %v199, %v270
    %v328 = vmul.f32 %v202, %v275
    %v329 = vmul.f32 %v204, %v280
    %v330 = vmul.f32 %v207, %v285
    %v331 = vmul.f32 %v209, %v290
    %v332 = vmul.f32 %v212, %v295
    %v333 = vmul.f32 %v214, %v300
    %v334 = vmul.f32 %v217, %v305
    %v335 = vmul.f32 %v219, %v310
    %v336 = vmul.f32 %v222, %v315
    %v337 = vmul.f32 %v224, %v320
    %v338 = vpack.c.bf16 %v323, %v322
    %v339 = vpack.c.bf16 %v325, %v324
    %v340 = vpack.c.bf16 %v327, %v326
    %v341 = vpack.c.bf16 %v329, %v328
    %v342 = vpack.c.bf16 %v331, %v330
    %v343 = vpack.c.bf16 %v333, %v332
    %v344 = vpack.c.bf16 %v335, %v334
    %v345 = vpack.c.bf16 %v337, %v336
    %v346 = vld [vmem:[%s2] sm:$0xff]
    %v347 = vld [vmem:[%s2 + $0x8] sm:$0xff]
    %v348 = vld [vmem:[%s2 + $0x10] sm:$0xff]
    %v349 = vld [vmem:[%s2 + $0x18] sm:$0xff]
    %v350 = vunpack.c.0.s8 %v346
    %v351 = vunpack.c.1.s8 %v346
    %v352 = vunpack.c.2.s8 %v346
    %v353 = vunpack.c.3.s8 %v346
    %v354 = vunpack.c.0.s8 %v347
    %v355 = vunpack.c.1.s8 %v347
    %v356 = vunpack.c.2.s8 %v347
    %v357 = vunpack.c.3.s8 %v347
    %v358 = vunpack.c.0.s8 %v348
    %v359 = vunpack.c.1.s8 %v348
    %v360 = vunpack.c.2.s8 %v348
    %v361 = vunpack.c.3.s8 %v348
    %v362 = vunpack.c.0.s8 %v349
    %v363 = vunpack.c.1.s8 %v349
    %v364 = vunpack.c.2.s8 %v349
    %v365 = vunpack.c.3.s8 %v349
    %v366 = vcvt.s32.f32 %v350
    %v367 = vcvt.s32.f32 %v351
    %v368 = vcvt.s32.f32 %v352
    %v369 = vcvt.s32.f32 %v353
    %v370 = vcvt.s32.f32 %v354
    %v371 = vcvt.s32.f32 %v355
    %v372 = vcvt.s32.f32 %v356
    %v373 = vcvt.s32.f32 %v357
    %v374 = vcvt.s32.f32 %v358
    %v375 = vcvt.s32.f32 %v359
    %v376 = vcvt.s32.f32 %v360
    %v377 = vcvt.s32.f32 %v361
    %v378 = vcvt.s32.f32 %v362
    %v379 = vcvt.s32.f32 %v363
    %v380 = vcvt.s32.f32 %v364
    %v381 = vcvt.s32.f32 %v365
    %v382 = vpack.c.bf16 %v367, %v366
    %v383 = vpack.c.bf16 %v369, %v368
    %v384 = vpack.c.bf16 %v371, %v370
    %v385 = vpack.c.bf16 %v373, %v372
    %v386 = vpack.c.bf16 %v375, %v374
    %v387 = vpack.c.bf16 %v377, %v376
    %v388 = vpack.c.bf16 %v379, %v378
    %v389 = vpack.c.bf16 %v381, %v380
    %v390 = vld [vmem:[#allocation2] sm:$0xff]
    %v391 = vld [vmem:[#allocation2 + $0x8] sm:$0xff]
    %v392 = vld [vmem:[#allocation2 + $0x10] sm:$0xff]
    %v393 = vld [vmem:[#allocation2 + $0x18] sm:$0xff]
    %v394 = vld [vmem:[#allocation2 + $0x20] sm:$0xff]
    %v395 = vld [vmem:[#allocation2 + $0x28] sm:$0xff]
    %v396 = vld [vmem:[#allocation2 + $0x30] sm:$0xff]
    %v397 = vld [vmem:[#allocation2 + $0x38] sm:$0xff]
    %v398 = vld [vmem:[#allocation2 + $0x40] sm:$0xff]
    %v399 = vld [vmem:[#allocation2 + $0x48] sm:$0xff]
    %v400 = vld [vmem:[#allocation2 + $0x50] sm:$0xff]
    %v401 = vld [vmem:[#allocation2 + $0x58] sm:$0xff]
    %v402 = vld [vmem:[#allocation2 + $0x60] sm:$0xff]
    %v403 = vld [vmem:[#allocation2 + $0x68] sm:$0xff]
    %v404 = vld [vmem:[#allocation2 + $0x70] sm:$0xff]
    %v405 = vld [vmem:[#allocation2 + $0x78] sm:$0xff]
    %406 = vmatpush.bf16.msra.mxu0 %v345
    %407 = vmatpush.bf16.msra.mxu0 %v344
    %408 = vmatpush.bf16.msra.mxu0 %v343
    %409 = vmatpush.bf16.msra.mxu0 %v342
    %410 = vmatpush.bf16.msra.mxu0 %v341
    %411 = vmatpush.bf16.msra.mxu0 %v340
    %412 = vmatpush.bf16.msra.mxu0 %v339
    %413 = vmatpush.bf16.msra.mxu0 %v338
    %414 = vmatmul.bf16.gmra.mxu0 %v382
    %v415 = vpop.f32.mrf.mxu0
    %v416 = vadd.f32 0.0, %v415
    %v417 = vpop.f32.mrf.mxu0
    %v418 = vadd.f32 0.0, %v417
    %419 = vmatmul.bf16.gmra.mxu0 %v383
    %v420 = vpop.f32.mrf.mxu0
    %v421 = vadd.f32 0.0, %v420
    %v422 = vpop.f32.mrf.mxu0
    %v423 = vadd.f32 0.0, %v422
    %424 = vmatmul.bf16.gmra.mxu0 %v384
    %v425 = vpop.f32.mrf.mxu0
    %v426 = vadd.f32 0.0, %v425
    %v427 = vpop.f32.mrf.mxu0
    %v428 = vadd.f32 0.0, %v427
    %429 = vmatmul.bf16.gmra.mxu0 %v385
    %v430 = vpop.f32.mrf.mxu0
    %v431 = vadd.f32 0.0, %v430
    %v432 = vpop.f32.mrf.mxu0
    %v433 = vadd.f32 0.0, %v432
    %434 = vmatmul.bf16.gmra.mxu0 %v386
    %v435 = vpop.f32.mrf.mxu0
    %v436 = vadd.f32 0.0, %v435
    %v437 = vpop.f32.mrf.mxu0
    %v438 = vadd.f32 0.0, %v437
    %439 = vmatmul.bf16.gmra.mxu0 %v387
    %v440 = vpop.f32.mrf.mxu0
    %v441 = vadd.f32 0.0, %v440
    %v442 = vpop.f32.mrf.mxu0
    %v443 = vadd.f32 0.0, %v442
    %444 = vmatmul.bf16.gmra.mxu0 %v388
    %v445 = vpop.f32.mrf.mxu0
    %v446 = vadd.f32 0.0, %v445
    %v447 = vpop.f32.mrf.mxu0
    %v448 = vadd.f32 0.0, %v447
    %449 = vmatmul.bf16.gmra.mxu0 %v389
    %v450 = vpop.f32.mrf.mxu0
    %v451 = vadd.f32 0.0, %v450
    %v452 = vpop.f32.mrf.mxu0
    %v453 = vadd.f32 0.0, %v452
    %454 = vdwg.mxu0
    %v455 = vadd.f32 %v390, %v416
    %v456 = vadd.f32 %v391, %v418
    %v457 = vadd.f32 %v392, %v421
    %v458 = vadd.f32 %v393, %v423
    %v459 = vadd.f32 %v394, %v426
    %v460 = vadd.f32 %v395, %v428
    %v461 = vadd.f32 %v396, %v431
    %v462 = vadd.f32 %v397, %v433
    %v463 = vadd.f32 %v398, %v436
    %v464 = vadd.f32 %v399, %v438
    %v465 = vadd.f32 %v400, %v441
    %v466 = vadd.f32 %v401, %v443
    %v467 = vadd.f32 %v402, %v446
    %v468 = vadd.f32 %v403, %v448
    %v469 = vadd.f32 %v404, %v451
    %v470 = vadd.f32 %v405, %v453
    %471 = vst [vmem:[#allocation2] sm:$0xff] %v455
    %472 = vst [vmem:[#allocation2 + $0x8] sm:$0xff] %v456
    %473 = vst [vmem:[#allocation2 + $0x10] sm:$0xff] %v457
    %474 = vst [vmem:[#allocation2 + $0x18] sm:$0xff] %v458
    %475 = vst [vmem:[#allocation2 + $0x20] sm:$0xff] %v459
    %476 = vst [vmem:[#allocation2 + $0x28] sm:$0xff] %v460
    %477 = vst [vmem:[#allocation2 + $0x30] sm:$0xff] %v461
    %478 = vst [vmem:[#allocation2 + $0x38] sm:$0xff] %v462
    %479 = vst [vmem:[#allocation2 + $0x40] sm:$0xff] %v463
    %480 = vst [vmem:[#allocation2 + $0x48] sm:$0xff] %v464
    %481 = vst [vmem:[#allocation2 + $0x50] sm:$0xff] %v465
    %482 = vst [vmem:[#allocation2 + $0x58] sm:$0xff] %v466
    %483 = vst [vmem:[#allocation2 + $0x60] sm:$0xff] %v467
    %484 = vst [vmem:[#allocation2 + $0x68] sm:$0xff] %v468
    %485 = vst [vmem:[#allocation2 + $0x70] sm:$0xff] %v469
    %486 = vst [vmem:[#allocation2 + $0x78] sm:$0xff] %v470
    // Predicated region
    $region30: #{tpu_custom_call.1} parent=1 // pred_check
      %p487 = pneg %p24
    $region31: #{tpu_custom_call.1} parent=1 // pred_check_branch
      %489 = sbr.rel (%p487) target = $region33
    $region32: #{tpu_custom_call.1} parent=1 // pred_region
      %v490 = vld [vmem:[#allocation2] sm:$0xff]
      %v491 = vld [vmem:[#allocation2 + $0x8] sm:$0xff]
      %v492 = vld [vmem:[#allocation2 + $0x10] sm:$0xff]
      %v493 = vld [vmem:[#allocation2 + $0x18] sm:$0xff]
      %v494 = vld [vmem:[#allocation2 + $0x20] sm:$0xff]
      %v495 = vld [vmem:[#allocation2 + $0x28] sm:$0xff]
      %v496 = vld [vmem:[#allocation2 + $0x30] sm:$0xff]
      %v497 = vld [vmem:[#allocation2 + $0x38] sm:$0xff]
      %v498 = vld [vmem:[#allocation2 + $0x40] sm:$0xff]
      %v499 = vld [vmem:[#allocation2 + $0x48] sm:$0xff]
      %v500 = vld [vmem:[#allocation2 + $0x50] sm:$0xff]
      %v501 = vld [vmem:[#allocation2 + $0x58] sm:$0xff]
      %v502 = vld [vmem:[#allocation2 + $0x60] sm:$0xff]
      %v503 = vld [vmem:[#allocation2 + $0x68] sm:$0xff]
      %v504 = vld [vmem:[#allocation2 + $0x70] sm:$0xff]
      %v505 = vld [vmem:[#allocation2 + $0x78] sm:$0xff]
      %v506 = vld [vmem:[%s1] sm:$0xff]
      %v507 = vld [vmem:[%s1 + $0x8] sm:$0xff]
      %v508 = vld [vmem:[%s1 + $0x10] sm:$0xff]
      %v509 = vld [vmem:[%s1 + $0x18] sm:$0xff]
      %v510 = vld [vmem:[%s1 + $0x20] sm:$0xff]
      %v511 = vld [vmem:[%s1 + $0x28] sm:$0xff]
      %v512 = vld [vmem:[%s1 + $0x30] sm:$0xff]
      %v513 = vld [vmem:[%s1 + $0x38] sm:$0xff]
      %v514 = vld [vmem:[%s1 + $0x40] sm:$0xff]
      %v515 = vld [vmem:[%s1 + $0x48] sm:$0xff]
      %v516 = vld [vmem:[%s1 + $0x50] sm:$0xff]
      %v517 = vld [vmem:[%s1 + $0x58] sm:$0xff]
      %v518 = vld [vmem:[%s1 + $0x60] sm:$0xff]
      %v519 = vld [vmem:[%s1 + $0x68] sm:$0xff]
      %v520 = vld [vmem:[%s1 + $0x70] sm:$0xff]
      %v521 = vld [vmem:[%s1 + $0x78] sm:$0xff]
      %523 = vset.pattern.permute.xlu0 0
      %524 = vperm.xlu0 %523, %v506
      %v525 = vpop.permute.xlu0 %524
      %528 = vset.pattern.permute.xlu0 0
      %529 = vperm.xlu0 %528, %v507
      %v530 = vpop.permute.xlu0 %529
      %533 = vset.pattern.permute.xlu0 0
      %534 = vperm.xlu0 %533, %v508
      %v535 = vpop.permute.xlu0 %534
      %538 = vset.pattern.permute.xlu0 0
      %539 = vperm.xlu0 %538, %v509
      %v540 = vpop.permute.xlu0 %539
      %543 = vset.pattern.permute.xlu0 0
      %544 = vperm.xlu0 %543, %v510
      %v545 = vpop.permute.xlu0 %544
      %548 = vset.pattern.permute.xlu0 0
      %549 = vperm.xlu0 %548, %v511
      %v550 = vpop.permute.xlu0 %549
      %553 = vset.pattern.permute.xlu0 0
      %554 = vperm.xlu0 %553, %v512
      %v555 = vpop.permute.xlu0 %554
      %558 = vset.pattern.permute.xlu0 0
      %559 = vperm.xlu0 %558, %v513
      %v560 = vpop.permute.xlu0 %559
      %563 = vset.pattern.permute.xlu0 0
      %564 = vperm.xlu0 %563, %v514
      %v565 = vpop.permute.xlu0 %564
      %568 = vset.pattern.permute.xlu0 0
      %569 = vperm.xlu0 %568, %v515
      %v570 = vpop.permute.xlu0 %569
      %573 = vset.pattern.permute.xlu0 0
      %574 = vperm.xlu0 %573, %v516
      %v575 = vpop.permute.xlu0 %574
      %578 = vset.pattern.permute.xlu0 0
      %579 = vperm.xlu0 %578, %v517
      %v580 = vpop.permute.xlu0 %579
      %583 = vset.pattern.permute.xlu0 0
      %584 = vperm.xlu0 %583, %v518
      %v585 = vpop.permute.xlu0 %584
      %588 = vset.pattern.permute.xlu0 0
      %589 = vperm.xlu0 %588, %v519
      %v590 = vpop.permute.xlu0 %589
      %593 = vset.pattern.permute.xlu0 0
      %594 = vperm.xlu0 %593, %v520
      %v595 = vpop.permute.xlu0 %594
      %598 = vset.pattern.permute.xlu0 0
      %599 = vperm.xlu0 %598, %v521
      %v600 = vpop.permute.xlu0 %599
      %v602 = vmul.f32 %v490, %v525
      %v603 = vmul.f32 %v491, %v530
      %v604 = vmul.f32 %v492, %v535
      %v605 = vmul.f32 %v493, %v540
      %v606 = vmul.f32 %v494, %v545
      %v607 = vmul.f32 %v495, %v550
      %v608 = vmul.f32 %v496, %v555
      %v609 = vmul.f32 %v497, %v560
      %v610 = vmul.f32 %v498, %v565
      %v611 = vmul.f32 %v499, %v570
      %v612 = vmul.f32 %v500, %v575
      %v613 = vmul.f32 %v501, %v580
      %v614 = vmul.f32 %v502, %v585
      %v615 = vmul.f32 %v503, %v590
      %v616 = vmul.f32 %v504, %v595
      %v617 = vmul.f32 %v505, %v600
      %v618 = vld [vmem:[%s5] sm:$0x1]
      %v620 = vperm.slane %v618, 0
      %v622 = vadd.f32 %v602, %v620
      %v623 = vadd.f32 %v603, %v620
      %v624 = vadd.f32 %v604, %v620
      %v625 = vadd.f32 %v605, %v620
      %v626 = vadd.f32 %v606, %v620
      %v627 = vadd.f32 %v607, %v620
      %v628 = vadd.f32 %v608, %v620
      %v629 = vadd.f32 %v609, %v620
      %v630 = vadd.f32 %v610, %v620
      %v631 = vadd.f32 %v611, %v620
      %v632 = vadd.f32 %v612, %v620
      %v633 = vadd.f32 %v613, %v620
      %v634 = vadd.f32 %v614, %v620
      %v635 = vadd.f32 %v615, %v620
      %v636 = vadd.f32 %v616, %v620
      %v637 = vadd.f32 %v617, %v620
      %v638 = vmax.f32 %v622, 0.0
      %v639 = vmax.f32 %v623, 0.0
      %v640 = vmax.f32 %v624, 0.0
      %v641 = vmax.f32 %v625, 0.0
      %v642 = vmax.f32 %v626, 0.0
      %v643 = vmax.f32 %v627, 0.0
      %v644 = vmax.f32 %v628, 0.0
      %v645 = vmax.f32 %v629, 0.0
      %v646 = vmax.f32 %v630, 0.0
      %v647 = vmax.f32 %v631, 0.0
      %v648 = vmax.f32 %v632, 0.0
      %v649 = vmax.f32 %v633, 0.0
      %v650 = vmax.f32 %v634, 0.0
      %v651 = vmax.f32 %v635, 0.0
      %v652 = vmax.f32 %v636, 0.0
      %v653 = vmax.f32 %v637, 0.0
      %v654 = vpack.c.bf16 %v638, %v638
      %v655 = vpack.c.bf16 %v639, %v639
      %v656 = vpack.c.bf16 %v640, %v640
      %v657 = vpack.c.bf16 %v641, %v641
      %v658 = vpack.c.bf16 %v642, %v642
      %v659 = vpack.c.bf16 %v643, %v643
      %v660 = vpack.c.bf16 %v644, %v644
      %v661 = vpack.c.bf16 %v645, %v645
      %v662 = vpack.c.bf16 %v646, %v646
      %v663 = vpack.c.bf16 %v647, %v647
      %v664 = vpack.c.bf16 %v648, %v648
      %v665 = vpack.c.bf16 %v649, %v649
      %v666 = vpack.c.bf16 %v650, %v650
      %v667 = vpack.c.bf16 %v651, %v651
      %v668 = vpack.c.bf16 %v652, %v652
      %v669 = vpack.c.bf16 %v653, %v653
      %670 = vst [vmem:[#allocation3] sm:$0xf] %v654
      %671 = vst [vmem:[#allocation3 + $0x4] sm:$0xf] %v655
      %672 = vst [vmem:[#allocation3 + $0x8] sm:$0xf] %v656
      %673 = vst [vmem:[#allocation3 + $0xc] sm:$0xf] %v657
      %674 = vst [vmem:[#allocation3 + $0x10] sm:$0xf] %v658
      %675 = vst [vmem:[#allocation3 + $0x14] sm:$0xf] %v659
      %676 = vst [vmem:[#allocation3 + $0x18] sm:$0xf] %v660
      %677 = vst [vmem:[#allocation3 + $0x1c] sm:$0xf] %v661
      %678 = vst [vmem:[#allocation3 + $0x20] sm:$0xf] %v662
      %679 = vst [vmem:[#allocation3 + $0x24] sm:$0xf] %v663
      %680 = vst [vmem:[#allocation3 + $0x28] sm:$0xf] %v664
      %681 = vst [vmem:[#allocation3 + $0x2c] sm:$0xf] %v665
      %682 = vst [vmem:[#allocation3 + $0x30] sm:$0xf] %v666
      %683 = vst [vmem:[#allocation3 + $0x34] sm:$0xf] %v667
      %684 = vst [vmem:[#allocation3 + $0x38] sm:$0xf] %v668
      %685 = vst [vmem:[#allocation3 + $0x3c] sm:$0xf] %v669
    $region33: #{tpu_custom_call.1} parent=1 // pred_fallthru
      _
    // Predicated region
    $region34: #{tpu_custom_call.1} parent=1 // pred_check
      _
    $region35: #{tpu_custom_call.1} parent=1 // pred_check_branch
      %687 = sbr.rel (0) target = $region37
    $region36: #{tpu_custom_call.1} parent=1 // pred_region
      %689 = vsyncadd [#allocation4], 0
      %s690 = sshll.u32 [#allocation3], 4
      %s691 = int_to_ptr.vmem [resolvable:$true] %s690
      %s692 = sshll.u32 %s6, 4
      %s693 = int_to_ptr.hbm [resolvable:$true] %s692
      %698 = dma.vmem_to_hbm [thread:$0]  %s691, 1024, %s693, [#allocation4], 64, 64, 4
    $region37: #{tpu_custom_call.1} parent=1 // pred_fallthru
      _
    // Predicated region
    $region38: #{tpu_custom_call.1} parent=1 // pred_check
      _
    $region39: #{tpu_custom_call.1} parent=1 // pred_check_branch
      %700 = sbr.rel (0) target = $region41
    $region40: #{tpu_custom_call.1} parent=1 // pred_region
      %702 = dma.done [#allocation4], 1024
    $region41: #{tpu_custom_call.1} parent=1 // pred_fallthru
      _
    %703 = vsyncpa [#allocation4], 1

</llo_original>
